<compile_context>
chip_gen: v6e
topology: v6e:2x2x1
jax: 0.10.0
libtpu: 0.0.40
codegen_flags: <defaults>
</compile_context>

<pallas_src>
import jax
import jax.numpy as jnp
from jax import lax
from jax.experimental import pallas as pl
from jax.experimental.pallas import tpu as pltpu

LN_EPS = 1e-5


# --------------------------------------------------------------------------- #
# Hardware-aware tile sizing helpers
# --------------------------------------------------------------------------- #
def _vmem_capacity_bytes():
    try:
        info = pltpu.get_tpu_info()
        cap = getattr(info, "vmem_capacity_bytes", None)
        if cap:
            return int(cap)
    except Exception:
        pass
    return 64 * 1024 * 1024  # conservative (v7x-sized) fallback


def _pick_tile(n, cap):
    """Largest divisor of n that is <= cap and a multiple of 8 (layout-legal),
    falling back to the full extent (always legal)."""
    if n <= cap:
        return n
    for t in range(cap - cap % 8, 7, -8):
        if n % t == 0:
            return t
    return n


def _choose_conv_tiles(n, d, ef_itemsize, vmem_cap):
    # Per-buffer budget for the dominant streamed operand (ef): ~1/8 of physical
    # VMEM, leaving room for double-buffering, the h tile, out tile and f32 acc.
    budget = max(vmem_cap // 8, 2 << 20)
    cap = 256
    while True:
        ti = _pick_tile(n, cap)
        tj = _pick_tile(n, cap)
        if ti * tj * d * ef_itemsize <= budget or cap <= 8:
            return ti, tj
        cap //= 2


# --------------------------------------------------------------------------- #
# Stage 1: h = SiLU(LayerNorm(s @ W^T + b))   (hoisted out of the ef stream)
# --------------------------------------------------------------------------- #
def _lin1_kernel(s_ref, w_ref, b_ref, g_ref, beta_ref, h_ref):
    x = s_ref[0].astype(jnp.float32)                                 # (TN, D)
    h = jnp.dot(x, w_ref[...], preferred_element_type=jnp.float32) + b_ref[...]
    mean = jnp.mean(h, axis=-1, keepdims=True)
    var = jnp.mean((h - mean) ** 2, axis=-1, keepdims=True)
    h = (h - mean) * lax.rsqrt(var + LN_EPS)
    h = h * g_ref[...] + beta_ref[...]                               # affine LN
    h = h * jax.nn.sigmoid(h)                                        # SiLU tail
    h_ref[0] = h.astype(h_ref.dtype)


# --------------------------------------------------------------------------- #
# Stage 2: streaming reduction  out[i,d] = sum_j ef[i,j,d] * h[j,d]
# --------------------------------------------------------------------------- #
def _conv_kernel(h_ref, ef_ref, o_ref, acc_ref):
    j = pl.program_id(2)

    @pl.when(j == 0)
    def _init():
        acc_ref[...] = jnp.zeros_like(acc_ref)

    ef = ef_ref[0].astype(jnp.float32)                               # (TI, TJ, D)
    h = h_ref[0].astype(jnp.float32)                                 # (TJ, D)
    # Accumulate the partial j-tile sum into the resident f32 accumulator.
    acc_ref[...] += jnp.sum(ef * h[None, :, :], axis=1)

    @pl.when(j == pl.num_programs(2) - 1)
    def _finalize():
        o_ref[0] = acc_ref[...].astype(o_ref.dtype)


# --------------------------------------------------------------------------- #
# Wrapper
# --------------------------------------------------------------------------- #
def dircfconv(s, ef_mask, w_t, bias, gamma, beta, *, tile_cap=None):
    B, N, D = s.shape
    assert ef_mask.shape == (B, N, N, D)

    f32 = jnp.float32
    w_t = w_t.astype(f32)
    bias2 = bias.reshape(1, D).astype(f32)
    gamma2 = gamma.reshape(1, D).astype(f32)
    beta2 = beta.reshape(1, D).astype(f32)

    vmem_cap = _vmem_capacity_bytes()

    # ---- stage 1: h = SiLU(LN(Linear(s))) -----------------------------------
    tn = _pick_tile(N, 256)
    h = pl.pallas_call(
        _lin1_kernel,
        out_shape=jax.ShapeDtypeStruct((B, N, D), jnp.float32),
        grid_spec=pltpu.PrefetchScalarGridSpec(
            num_scalar_prefetch=0,
            grid=(B, N // tn),
            in_specs=[
                pl.BlockSpec((1, tn, D), lambda b, n: (b, n, 0)),    # s
                pl.BlockSpec((D, D), lambda b, n: (0, 0)),           # W^T
                pl.BlockSpec((1, D), lambda b, n: (0, 0)),           # bias
                pl.BlockSpec((1, D), lambda b, n: (0, 0)),           # gamma
                pl.BlockSpec((1, D), lambda b, n: (0, 0)),           # beta
            ],
            out_specs=pl.BlockSpec((1, tn, D), lambda b, n: (b, n, 0)),
        ),
        compiler_params=pltpu.CompilerParams(
            dimension_semantics=("parallel", "parallel"),
        ),
    )(s, w_t, bias2, gamma2, beta2)

    # ---- stage 2: streaming j-reduction over ef_mask ------------------------
    ef_itemsize = jnp.dtype(ef_mask.dtype).itemsize
    ti, tj = _choose_conv_tiles(N, D, ef_itemsize, vmem_cap)
    if tile_cap is not None:  # allow forcing small tiles (test / tuning)
        ti = min(ti, _pick_tile(N, tile_cap))
        tj = min(tj, _pick_tile(N, tile_cap))

    # VMEM estimate: double-buffered ef + h + out tiles, plus f32 accumulator.
    est = (2 * ti * tj * D * ef_itemsize
           + 2 * tj * D * 4
           + 2 * ti * D * jnp.dtype(s.dtype).itemsize
           + ti * D * 4)
    vmem_limit = int(min(vmem_cap * 0.9, max(2 * est, 32 << 20)))

    # TODO(synk): if production D < 128, repack the last axis lane-dense
    # (e.g. fold i-rows into lanes) instead of padding D, which would inflate
    # the dominant ef HBM stream.
    return pl.pallas_call(
        _conv_kernel,
        out_shape=jax.ShapeDtypeStruct((B, N, D), s.dtype),
        grid_spec=pltpu.PrefetchScalarGridSpec(
            num_scalar_prefetch=0,
            grid=(B, N // ti, N // tj),
            in_specs=[
                pl.BlockSpec((1, tj, D), lambda b, i, j: (b, j, 0)),         # h
                pl.BlockSpec((1, ti, tj, D), lambda b, i, j: (b, i, j, 0)),  # ef
            ],
            out_specs=pl.BlockSpec((1, ti, D), lambda b, i, j: (b, i, 0)),
            scratch_shapes=[pltpu.VMEM((ti, D), jnp.float32)],
        ),
        compiler_params=pltpu.CompilerParams(
            dimension_semantics=("parallel", "parallel", "arbitrary"),
            vmem_limit_bytes=vmem_limit,
        ),
    )(h, ef_mask)


# --------------------------------------------------------------------------- #
# Pure-JAX reference
# --------------------------------------------------------------------------- #
def dircfconv_ref(s, ef_mask, w_t, bias, gamma, beta):
    h = jnp.dot(s.astype(jnp.float32), w_t.astype(jnp.float32)) + bias
    mean = jnp.mean(h, axis=-1, keepdims=True)
    var = jnp.mean((h - mean) ** 2, axis=-1, keepdims=True)
    h = (h - mean) * lax.rsqrt(var + LN_EPS)
    h = h * gamma + beta
    h = h * jax.nn.sigmoid(h)
    out = jnp.sum(ef_mask.astype(jnp.float32) * h[:, None, :, :], axis=2)
    return out.astype(s.dtype)


if __name__ == "__main__":
    B, N, D = 2, 16, 32
    key = jax.random.PRNGKey(0)
    k1, k2, k3, k4, k5, k6 = jax.random.split(key, 6)

    s = jax.random.normal(k1, (B, N, D), dtype=jnp.float32)
    ef_mask = jax.random.normal(k2, (B, N, N, D), dtype=jnp.float32)

    # Parameters (mimicking nn.Linear / nn.LayerNorm shapes)
    bound = 1.0 / (D ** 0.5)
    w = jax.random.uniform(k3, (D, D), minval=-bound, maxval=bound,
                           dtype=jnp.float32)       # PyTorch layout (out, in)
    bias = jax.random.uniform(k4, (D,), minval=-bound, maxval=bound,
                              dtype=jnp.float32)
    gamma = jnp.ones((D,), dtype=jnp.float32) \
        + 0.1 * jax.random.normal(k5, (D,), dtype=jnp.float32)
    beta = 0.1 * jax.random.normal(k6, (D,), dtype=jnp.float32)

    w_t = w.T  # pass as (in, out) so the kernel does x @ W^T + b

    ref = dircfconv_ref(s, ef_mask, w_t, bias, gamma, beta)

    # 1) default (single j-tile at this toy size)
    out = jax.block_until_ready(dircfconv(s, ef_mask, w_t, bias, gamma, beta))
    assert out.shape == (B, N, D)
    assert jnp.allclose(out, ref, rtol=1e-2, atol=1e-2), "mismatch (default tiling)"

    # 2) force small tiles to exercise the multi-step j-reduction / accumulator
    out_tiled = jax.block_until_ready(
        dircfconv(s, ef_mask, w_t, bias, gamma, beta, tile_cap=8))
    assert jnp.allclose(out_tiled, ref, rtol=1e-2, atol=1e-2), "mismatch (tiled j)"

    print("KERNEL_OK")
</pallas_src>

<mosaic_0001>
module attributes {stable_mosaic.version = 11 : i64} {
  func.func @_lin1_kernel(%arg0: i32, %arg1: i32, %arg2: memref<1x16x32xf32, #tpu.memory_space<vmem>>, %arg3: memref<32x32xf32, #tpu.memory_space<vmem>>, %arg4: memref<1x32xf32, #tpu.memory_space<vmem>>, %arg5: memref<1x32xf32, #tpu.memory_space<vmem>>, %arg6: memref<1x32xf32, #tpu.memory_space<vmem>>, %arg7: memref<1x16x32xf32, #tpu.memory_space<vmem>>) attributes {dimension_semantics = [#tpu.dimension_semantics<parallel>, #tpu.dimension_semantics<parallel>], iteration_bounds = array<i64: 2, 1>, scalar_prefetch = 0 : i64, scratch_operands = 0 : i64, tpu.core_type = #tpu.core_type<tc>, window_params = [{transform_indices = @transform_0, window_bounds = array<i64: 1, 16, 32>}, {pipeline_mode = #tpu.pipeline_mode<synchronous>, transform_indices = @transform_1, window_bounds = array<i64: 32, 32>}, {pipeline_mode = #tpu.pipeline_mode<synchronous>, transform_indices = @transform_2, window_bounds = array<i64: 1, 32>}, {pipeline_mode = #tpu.pipeline_mode<synchronous>, transform_indices = @transform_3, window_bounds = array<i64: 1, 32>}, {pipeline_mode = #tpu.pipeline_mode<synchronous>, transform_indices = @transform_4, window_bounds = array<i64: 1, 32>}, {transform_indices = @transform_5, window_bounds = array<i64: 1, 16, 32>}]} {
    %c0 = arith.constant 0 : index
    %c0_0 = arith.constant 0 : index
    %c0_1 = arith.constant 0 : index
    %0 = vector.load %arg2[%c0, %c0_0, %c0_1] : memref<1x16x32xf32, #tpu.memory_space<vmem>>, vector<1x16x32xf32>
    %1 = vector.shape_cast %0 : vector<1x16x32xf32> to vector<16x32xf32>
    %c0_2 = arith.constant 0 : index
    %c0_3 = arith.constant 0 : index
    %2 = vector.load %arg3[%c0_2, %c0_3] : memref<32x32xf32, #tpu.memory_space<vmem>>, vector<32x32xf32>
    %cst = arith.constant dense<0.000000e+00> : vector<16x32xf32>
    %3 = tpu.matmul %1, %2, %cst {dimension_numbers = #tpu.dot_dimension_numbers<[1], [0], [0], [1], [0, 0, 1, 1], [], []>} : vector<16x32xf32>, vector<32x32xf32>, vector<16x32xf32> -> vector<16x32xf32>
    %c0_4 = arith.constant 0 : index
    %c0_5 = arith.constant 0 : index
    %4 = vector.load %arg4[%c0_4, %c0_5] : memref<1x32xf32, #tpu.memory_space<vmem>>, vector<1x32xf32>
    %5 = vector.broadcast %4 : vector<1x32xf32> to vector<16x32xf32>
    %6 = arith.addf %3, %5 : vector<16x32xf32>
    %cst_6 = arith.constant dense<0.000000e+00> : vector<16xf32>
    %7 = vector.multi_reduction <add>, %6, %cst_6 [1] : vector<16x32xf32> to vector<16xf32>
    %8 = vector.shape_cast %7 : vector<16xf32> to vector<16x1xf32>
    %cst_7 = arith.constant 3.200000e+01 : f32
    %9 = vector.broadcast %cst_7 : f32 to vector<16x1xf32>
    %10 = arith.divf %8, %9 : vector<16x1xf32>
    %11 = vector.broadcast %10 : vector<16x1xf32> to vector<16x32xf32>
    %12 = arith.subf %6, %11 : vector<16x32xf32>
    %13 = arith.mulf %12, %12 : vector<16x32xf32>
    %cst_8 = arith.constant dense<0.000000e+00> : vector<16xf32>
    %14 = vector.multi_reduction <add>, %13, %cst_8 [1] : vector<16x32xf32> to vector<16xf32>
    %15 = vector.shape_cast %14 : vector<16xf32> to vector<16x1xf32>
    %cst_9 = arith.constant 3.200000e+01 : f32
    %16 = vector.broadcast %cst_9 : f32 to vector<16x1xf32>
    %17 = arith.divf %15, %16 : vector<16x1xf32>
    %18 = vector.broadcast %10 : vector<16x1xf32> to vector<16x32xf32>
    %19 = arith.subf %6, %18 : vector<16x32xf32>
    %cst_10 = arith.constant 9.99999974E-6 : f32
    %20 = vector.broadcast %cst_10 : f32 to vector<16x1xf32>
    %21 = arith.addf %17, %20 : vector<16x1xf32>
    %22 = math.rsqrt %21 : vector<16x1xf32>
    %23 = vector.broadcast %22 : vector<16x1xf32> to vector<16x32xf32>
    %24 = arith.mulf %19, %23 : vector<16x32xf32>
    %c0_11 = arith.constant 0 : index
    %c0_12 = arith.constant 0 : index
    %25 = vector.load %arg5[%c0_11, %c0_12] : memref<1x32xf32, #tpu.memory_space<vmem>>, vector<1x32xf32>
    %26 = vector.broadcast %25 : vector<1x32xf32> to vector<16x32xf32>
    %27 = arith.mulf %24, %26 : vector<16x32xf32>
    %c0_13 = arith.constant 0 : index
    %c0_14 = arith.constant 0 : index
    %28 = vector.load %arg6[%c0_13, %c0_14] : memref<1x32xf32, #tpu.memory_space<vmem>>, vector<1x32xf32>
    %29 = vector.broadcast %28 : vector<1x32xf32> to vector<16x32xf32>
    %30 = arith.addf %27, %29 : vector<16x32xf32>
    %31 = arith.negf %30 : vector<16x32xf32>
    %32 = math.exp %31 : vector<16x32xf32>
    %cst_15 = arith.constant 1.000000e+00 : f32
    %33 = vector.broadcast %cst_15 : f32 to vector<16x32xf32>
    %34 = arith.addf %33, %32 : vector<16x32xf32>
    %35 = arith.divf %33, %34 : vector<16x32xf32>
    %36 = arith.mulf %30, %35 : vector<16x32xf32>
    %c0_16 = arith.constant 0 : index
    %c0_17 = arith.constant 0 : index
    %c0_18 = arith.constant 0 : index
    %37 = vector.load %arg7[%c0_16, %c0_17, %c0_18] : memref<1x16x32xf32, #tpu.memory_space<vmem>>, vector<1x16x32xf32>
    %38 = vector.shape_cast %37 : vector<1x16x32xf32> to vector<16x32xf32>
    %39 = vector.shape_cast %36 : vector<16x32xf32> to vector<1x16x32xf32>
    tpu.vector_store %arg7[%c0_16, %c0_17, %c0_18], %39 {strides = array<i32>} : memref<1x16x32xf32, #tpu.memory_space<vmem>>, vector<1x16x32xf32>,
    return
  }
  func.func @transform_0(%arg0: i32, %arg1: i32) -> (i32, i32, i32) {
    %c0_i32 = arith.constant 0 : i32
    %c0_i32_0 = arith.constant 0 : i32
    return %arg0, %arg1, %c0_i32 : i32, i32, i32
  }
  func.func @transform_1(%arg0: i32, %arg1: i32) -> (i32, i32) {
    %c0_i32 = arith.constant 0 : i32
    %c0_i32_0 = arith.constant 0 : i32
    %c0_i32_1 = arith.constant 0 : i32
    return %c0_i32, %c0_i32_0 : i32, i32
  }
  func.func @transform_2(%arg0: i32, %arg1: i32) -> (i32, i32) {
    %c0_i32 = arith.constant 0 : i32
    %c0_i32_0 = arith.constant 0 : i32
    %c0_i32_1 = arith.constant 0 : i32
    return %c0_i32, %c0_i32_0 : i32, i32
  }
  func.func @transform_3(%arg0: i32, %arg1: i32) -> (i32, i32) {
    %c0_i32 = arith.constant 0 : i32
    %c0_i32_0 = arith.constant 0 : i32
    %c0_i32_1 = arith.constant 0 : i32
    return %c0_i32, %c0_i32_0 : i32, i32
  }
  func.func @transform_4(%arg0: i32, %arg1: i32) -> (i32, i32) {
    %c0_i32 = arith.constant 0 : i32
    %c0_i32_0 = arith.constant 0 : i32
    %c0_i32_1 = arith.constant 0 : i32
    return %c0_i32, %c0_i32_0 : i32, i32
  }
  func.func @transform_5(%arg0: i32, %arg1: i32) -> (i32, i32, i32) {
    %c0_i32 = arith.constant 0 : i32
    %c0_i32_0 = arith.constant 0 : i32
    return %arg0, %arg1, %c0_i32 : i32, i32, i32
  }
}

</mosaic_0001>

<llo_original>
// kernel: tpu_custom_call.1
$region0: #{tpu_custom_call.1}
  #allocation0 [shape = 'u32[]', space=smem, size = 0x4, offset = 0x4, fixed_abs, tag = 'smem constant byte address 0x4 - core index']
  #allocation1 [shape = 'u32[144,128]{1,0:T(1,128)}', space=vmem, size = 0x12000, scoped, tag = 'internal scratch']
  %s0 = inlined_call_operand.hbm [shape: f32[2,16,32], index: 0, kind: input, shape index: {}]
  %s1 = inlined_call_operand.hbm [shape: f32[32,32], index: 1, kind: input, shape index: {}]
  %s2 = inlined_call_operand.vmem [shape: f32[1,32], index: 2, kind: input, shape index: {}]
  %s3 = inlined_call_operand.vmem [shape: f32[1,32], index: 3, kind: input, shape index: {}]
  %s4 = inlined_call_operand.vmem [shape: f32[1,32], index: 4, kind: input, shape index: {}]
  %s5 = inlined_call_operand.hbm [shape: f32[2,16,32], index: 5, kind: output, shape index: {}]
  %s6 = sld [smem:[#allocation0]]
  $region61: #{tpu_custom_call.1} parent=0
    _
  %s8 = ssub.s32 1, %s6
  %s9 = scalar_select 0, %s8, %s6
  $region1: #{tpu_custom_call.1} parent=0
    #allocation2 [shape = 'u8[16384]{0}', space=vmem, size = 0x4000, scoped, tag = 'input window, operand 0']
    #allocation3 [shape = 's32[2]{0}', space=sflag, size = 0x8, scoped, tag = 'scoped memory for tpu_custom_call.1']
    #allocation4 [shape = 's32[2]{0}', space=sflag, size = 0x8, scoped, tag = 'scoped memory for tpu_custom_call.1']
    #allocation5 [shape = 'u8[16384]{0}', space=vmem, size = 0x4000, scoped, tag = 'input window, operand 1, single buffered']
    #allocation6 [shape = 's32[1]{0}', space=sflag, size = 0x4, scoped, tag = 'scoped memory for tpu_custom_call.1']
    #allocation7 [shape = 'u8[16384]{0}', space=vmem, size = 0x4000, scoped, tag = 'output window, operand 0']
    %10 = vsyncpa [#allocation3], 0
    %s11 = scalar_lea.sflag [#allocation3], 1
    %12 = vsyncpa %s11, 0
    %13 = vsyncpa [#allocation6], 0
    %14 = vsyncpa [#allocation4], 0
    %s15 = scalar_lea.sflag [#allocation4], 1
    %16 = vsyncpa %s15, 0
    loop: start=0, step=1, limit=4
    $region2: #{tpu_custom_call.1} parent=1 // loop_pre_header
      _
    $region3: #{tpu_custom_call.1} parent=1 // loop_header
      %s18 = sphi 0, %s22
      %p19 = scmp.ge.s32.totalorder %s18, 4
      %s25 = sphi 0, %s37
      %s26 = sphi 0, %s33
      %s27 = sphi 0, %s25
      %s28 = sphi 0, %s26
      %s29 = sphi 0, %s27
      %s30 = sphi 0, %s28
      %s42 = sphi 0, %s44
      %s45 = sphi 0, %s42
      %s46 = sphi 0, %s45
      %s62 = sphi 0, %s46
      %s66 = sphi 0, %s66
      %s68 = sphi 0, %s66
      %s69 = sphi 0, %s68
      %s83 = sphi 0, %s69
      %s87 = sphi 0, %s87
      %s89 = sphi 0, %s87
      %s90 = sphi 0, %s89
      %s104 = sphi 0, %s90
      %s108 = sphi 0, %s108
      %s110 = sphi 0, %s108
      %s111 = sphi 0, %s110
      %s125 = sphi 0, %s111
      %s129 = sphi 0, %s129
      %s131 = sphi 0, %s129
      %s132 = sphi 0, %s131
      %s146 = sphi 0, %s132
      %s154 = sphi 0, %s156
      %s157 = sphi 0, %s154
      %s158 = sphi 0, %s157
      %s174 = sphi 0, %s158
    $region4: #{tpu_custom_call.1} parent=1 // loop_header_branch
      %21 = sbr.rel (%p19) target = $region8
    $region5: #{tpu_custom_call.1} parent=1 // loop_body
      %s23 = ssub.s32 %s18, 1
      %s24 = ssub.s32 %s18, 2
      %s31 = sadd.s32 1, %s26
      %p32 = scmp.ge.s32.totalorder %s31, 1
      %s33 = scalar_select %p32, 0, %s31
      %s34 = sadd.s32 1, %s25
      %s35 = scalar_select %p32, %s34, %s25
      %p36 = scmp.ge.s32.totalorder %s35, 2
      %s37 = scalar_select %p36, 0, %s35
      %s38 = ssub.s32 %s25, %s37
      %s39 = ssub.s32 %s26, %s33
      %s40 = sor.u32 %s38, %s39
      %p41 = scmp.eq.s32.totalorder %s40, 0
      %s43 = sadd.s32 %s42, 1
      %s44 = scalar_select %p41, %s42, %s43
      %p47 = pneg %p41
      %p48 = scmp.eq.s32.totalorder %s18, 1
      %p49 = por %p47, %p48
      %p50 = scmp.ne.s32.totalorder %s42, %s45
      %p51 = scmp.eq.s32.totalorder %s18, 0
      %p52 = por %p50, %p51
      %p53 = scmp.ne.s32.totalorder %s42, %s45
      %p54 = scmp.eq.s32.totalorder %s23, 1
      %p55 = por %p53, %p54
      %p56 = scmp.ne.s32.totalorder %s45, %s46
      %p57 = scmp.eq.s32.totalorder %s23, 0
      %p58 = por %p56, %p57
      %p59 = scmp.ne.s32.totalorder %s45, %s46
      %p60 = scmp.eq.s32.totalorder %s24, 1
      %p61 = por %p59, %p60
      %p63 = scmp.ne.s32.totalorder %s46, %s62
      %p64 = scmp.eq.s32.totalorder %s24, 0
      %p65 = por %p63, %p64
      %s67 = sadd.s32 %s66, 1
      %p70 = scmp.eq.s32.totalorder %s18, 1
      %p71 = scmp.ne.s32.totalorder %s66, %s68
      %p72 = scmp.eq.s32.totalorder %s18, 0
      %p73 = por %p71, %p72
      %p74 = scmp.ne.s32.totalorder %s66, %s68
      %p75 = scmp.eq.s32.totalorder %s23, 1
      %p76 = por %p74, %p75
      %p77 = scmp.ne.s32.totalorder %s68, %s69
      %p78 = scmp.eq.s32.totalorder %s23, 0
      %p79 = por %p77, %p78
      %p80 = scmp.ne.s32.totalorder %s68, %s69
      %p81 = scmp.eq.s32.totalorder %s24, 1
      %p82 = por %p80, %p81
      %p84 = scmp.ne.s32.totalorder %s69, %s83
      %p85 = scmp.eq.s32.totalorder %s24, 0
      %p86 = por %p84, %p85
      %s88 = sadd.s32 %s87, 1
      %p91 = scmp.eq.s32.totalorder %s18, 1
      %p92 = scmp.ne.s32.totalorder %s87, %s89
      %p93 = scmp.eq.s32.totalorder %s18, 0
      %p94 = por %p92, %p93
      %p95 = scmp.ne.s32.totalorder %s87, %s89
      %p96 = scmp.eq.s32.totalorder %s23, 1
      %p97 = por %p95, %p96
      %p98 = scmp.ne.s32.totalorder %s89, %s90
      %p99 = scmp.eq.s32.totalorder %s23, 0
      %p100 = por %p98, %p99
      %p101 = scmp.ne.s32.totalorder %s89, %s90
      %p102 = scmp.eq.s32.totalorder %s24, 1
      %p103 = por %p101, %p102
      %p105 = scmp.ne.s32.totalorder %s90, %s104
      %p106 = scmp.eq.s32.totalorder %s24, 0
      %p107 = por %p105, %p106
      %s109 = sadd.s32 %s108, 1
      %p112 = scmp.eq.s32.totalorder %s18, 1
      %p113 = scmp.ne.s32.totalorder %s108, %s110
      %p114 = scmp.eq.s32.totalorder %s18, 0
      %p115 = por %p113, %p114
      %p116 = scmp.ne.s32.totalorder %s108, %s110
      %p117 = scmp.eq.s32.totalorder %s23, 1
      %p118 = por %p116, %p117
      %p119 = scmp.ne.s32.totalorder %s110, %s111
      %p120 = scmp.eq.s32.totalorder %s23, 0
      %p121 = por %p119, %p120
      %p122 = scmp.ne.s32.totalorder %s110, %s111
      %p123 = scmp.eq.s32.totalorder %s24, 1
      %p124 = por %p122, %p123
      %p126 = scmp.ne.s32.totalorder %s111, %s125
      %p127 = scmp.eq.s32.totalorder %s24, 0
      %p128 = por %p126, %p127
      %s130 = sadd.s32 %s129, 1
      %p133 = scmp.eq.s32.totalorder %s18, 1
      %p134 = scmp.ne.s32.totalorder %s129, %s131
      %p135 = scmp.eq.s32.totalorder %s18, 0
      %p136 = por %p134, %p135
      %p137 = scmp.ne.s32.totalorder %s129, %s131
      %p138 = scmp.eq.s32.totalorder %s23, 1
      %p139 = por %p137, %p138
      %p140 = scmp.ne.s32.totalorder %s131, %s132
      %p141 = scmp.eq.s32.totalorder %s23, 0
      %p142 = por %p140, %p141
      %p143 = scmp.ne.s32.totalorder %s131, %s132
      %p144 = scmp.eq.s32.totalorder %s24, 1
      %p145 = por %p143, %p144
      %p147 = scmp.ne.s32.totalorder %s132, %s146
      %p148 = scmp.eq.s32.totalorder %s24, 0
      %p149 = por %p147, %p148
      %s150 = ssub.s32 %s25, %s37
      %s151 = ssub.s32 %s26, %s33
      %s152 = sor.u32 %s150, %s151
      %p153 = scmp.eq.s32.totalorder %s152, 0
      %s155 = sadd.s32 %s154, 1
      %s156 = scalar_select %p153, %s154, %s155
      %p159 = pneg %p153
      %p160 = scmp.eq.s32.totalorder %s18, 1
      %p161 = por %p159, %p160
      %p162 = scmp.ne.s32.totalorder %s154, %s157
      %p163 = scmp.eq.s32.totalorder %s18, 0
      %p164 = por %p162, %p163
      %p165 = scmp.ne.s32.totalorder %s154, %s157
      %p166 = scmp.eq.s32.totalorder %s23, 1
      %p167 = por %p165, %p166
      %p168 = scmp.ne.s32.totalorder %s157, %s158
      %p169 = scmp.eq.s32.totalorder %s23, 0
      %p170 = por %p168, %p169
      %p171 = scmp.ne.s32.totalorder %s157, %s158
      %p172 = scmp.eq.s32.totalorder %s24, 1
      %p173 = por %p171, %p172
      %p175 = scmp.ne.s32.totalorder %s158, %s174
      %p176 = scmp.eq.s32.totalorder %s24, 0
      %p177 = por %p175, %p176
      %p178 = scmp.le.s32.totalorder 1, %s18
      %p179 = scmp.lt.s32.totalorder %s18, 3
      %p180 = pnand %p178, %p179
      %p181 = pneg %p180
      // Predicated region
      $region9: #{tpu_custom_call.1} parent=5 // pred_check
        _
      $region10: #{tpu_custom_call.1} parent=5 // pred_check_branch
        %183 = sbr.rel (%p180) target = $region12
      $region11: #{tpu_custom_call.1} parent=5 // pred_region
        %s184 = ssub.s32 %s18, 1
        // Predicated region
        $region13: #{tpu_custom_call.1} parent=11 // pred_check
          %p185 = pneg %p79
        $region14: #{tpu_custom_call.1} parent=11 // pred_check_branch
          %187 = sbr.rel (%p185) target = $region16
        $region15: #{tpu_custom_call.1} parent=11 // pred_region
          %s189 = ssub.s32 512, 512
          %190 = vsyncadd [#allocation6], %s189
          %s191 = sshll.u32 [#allocation5], 4
          %s192 = int_to_ptr.vmem [resolvable:$true] %s191
          %197 = dma.hbm_to_vmem [thread:$0]  %s1, 512, %s192, [#allocation6], 128, 128, 8
        $region16: #{tpu_custom_call.1} parent=11 // pred_fallthru
          _
        // Predicated region
        $region17: #{tpu_custom_call.1} parent=11 // pred_check
          %p198 = pneg %p100
        $region18: #{tpu_custom_call.1} parent=11 // pred_check_branch
          %200 = sbr.rel (%p198) target = $region20
        $region19: #{tpu_custom_call.1} parent=11 // pred_region
          _
        $region20: #{tpu_custom_call.1} parent=11 // pred_fallthru
          _
        // Predicated region
        $region21: #{tpu_custom_call.1} parent=11 // pred_check
          %p201 = pneg %p121
        $region22: #{tpu_custom_call.1} parent=11 // pred_check_branch
          %203 = sbr.rel (%p201) target = $region24
        $region23: #{tpu_custom_call.1} parent=11 // pred_region
          _
        $region24: #{tpu_custom_call.1} parent=11 // pred_fallthru
          _
        // Predicated region
        $region25: #{tpu_custom_call.1} parent=11 // pred_check
          %p204 = pneg %p142
        $region26: #{tpu_custom_call.1} parent=11 // pred_check_branch
          %206 = sbr.rel (%p204) target = $region28
        $region27: #{tpu_custom_call.1} parent=11 // pred_region
          _
        $region28: #{tpu_custom_call.1} parent=11 // pred_fallthru
          _
      $region12: #{tpu_custom_call.1} parent=5 // pred_fallthru
        _
      %p207 = scmp.lt.s32.totalorder %s18, 2
      // Predicated region
      $region29: #{tpu_custom_call.1} parent=5 // pred_check
        %p208 = pneg %p207
      $region30: #{tpu_custom_call.1} parent=5 // pred_check_branch
        %210 = sbr.rel (%p208) target = $region32
      $region31: #{tpu_custom_call.1} parent=5 // pred_region
        // Predicated region
        $region33: #{tpu_custom_call.1} parent=31 // pred_check
          %p211 = pneg %p52
        $region34: #{tpu_custom_call.1} parent=31 // pred_check_branch
          %213 = sbr.rel (%p211) target = $region36
        $region35: #{tpu_custom_call.1} parent=31 // pred_region
          %s214 = sand.u32 %s42, 1
          %s215 = scalar_lea.sflag [#allocation3], %s214
          %s216 = sand.u32 %s42, 1
          %s217 = smul.addr %s216, 16
          %s218 = scalar_lea.vmem [#allocation2], %s217
          %s219 = smul.u32 2, %s26
          %s221 = ssub.s32 256, 256
          %222 = vsyncadd %s215, %s221
          %s223 = smul.addr %s25, 2
          %s224 = sadd.s32 %s219, %s223
          %s225 = smul.addr %s224, 128
          %s226 = scalar_lea.hbm %s0, %s225
          %s227 = sshll.u32 %s218, 4
          %s228 = int_to_ptr.vmem [resolvable:$true] %s227
          %233 = dma.hbm_to_vmem [thread:$0]  %s226, 256, %s228, %s215, 128, 128, 8
        $region36: #{tpu_custom_call.1} parent=31 // pred_fallthru
          _
      $region32: #{tpu_custom_call.1} parent=5 // pred_fallthru
        _
      %p234 = scmp.le.s32.totalorder 1, %s18
      %p235 = scmp.lt.s32.totalorder %s18, 3
      %p236 = pnand %p234, %p235
      %p237 = pneg %p236
      // Predicated region
      $region37: #{tpu_custom_call.1} parent=5 // pred_check
        _
      $region38: #{tpu_custom_call.1} parent=5 // pred_check_branch
        %239 = sbr.rel (%p236) target = $region40
      $region39: #{tpu_custom_call.1} parent=5 // pred_region
        %s240 = ssub.s32 %s18, 1
        %s241 = sand.u32 %s45, 1
        %s242 = scalar_lea.sflag [#allocation3], %s241
        %s243 = sand.u32 %s45, 1
        %s244 = smul.addr %s243, 16
        %s245 = scalar_lea.vmem [#allocation2], %s244
        // Predicated region
        $region41: #{tpu_custom_call.1} parent=39 // pred_check
          %p246 = pneg %p58
        $region42: #{tpu_custom_call.1} parent=39 // pred_check_branch
          %248 = sbr.rel (%p246) target = $region44
        $region43: #{tpu_custom_call.1} parent=39 // pred_region
          %249 = dma.done %s242, 256
        $region44: #{tpu_custom_call.1} parent=39 // pred_fallthru
          _
        // Predicated region
        $region45: #{tpu_custom_call.1} parent=39 // pred_check
          %p250 = pneg %p79
        $region46: #{tpu_custom_call.1} parent=39 // pred_check_branch
          %252 = sbr.rel (%p250) target = $region48
        $region47: #{tpu_custom_call.1} parent=39 // pred_region
          %253 = dma.done [#allocation6], 512
        $region48: #{tpu_custom_call.1} parent=39 // pred_fallthru
          _
        %s254 = sand.u32 %s45, 1
        %s255 = scalar_lea.sflag [#allocation3], %s254
        %s256 = sand.u32 %s45, 1
        %s257 = smul.addr %s256, 16
        %s258 = scalar_lea.vmem [#allocation2], %s257
        %p259 = pneg %p58
        %p260 = pneg %p55
        %p261 = pneg %p79
        %p262 = pneg %p76
        %p263 = pneg %p100
        %p264 = pneg %p97
        %p265 = pneg %p121
        %p266 = pneg %p118
        %p267 = pneg %p142
        %p268 = pneg %p139
        %p269 = pneg %p170
        %p270 = pneg %p167
        %s271 = sand.u32 %s157, 1
        %s272 = scalar_lea.sflag [#allocation4], %s271
        %s273 = sand.u32 %s157, 1
        %s274 = smul.addr %s273, 16
        %s275 = scalar_lea.vmem [#allocation7], %s274
        %s276 = smul.u32 2, %s28
        %s277 = smul.u32 2, %s28
        %v278 = vld [vmem:[%s245] sm:$0xff]
        %v279 = vld [vmem:[%s245 + $0x8] sm:$0xff]
        %v280 = vld [vmem:[#allocation5] sm:$0xff]
        %v281 = vld [vmem:[#allocation5 + $0x8] sm:$0xff]
        %v282 = vld [vmem:[#allocation5 + $0x10] sm:$0xff]
        %v283 = vld [vmem:[#allocation5 + $0x18] sm:$0xff]
        %v284 = vld [vmem:[%s2] sm:$0x1]
        %v286 = vlaneseq
        %v287 = vshrl.u32 %v286, 7
        %v288 = vsub.s32 0, %v287
        %v289 = vrot.slane %v284, %v288
        %vm291 = vcmask 261120
        %v293 = vsel %vm291, %v278, 0
        %v296 = vsel %vm291, %v279, 0
        %298 = vmatprep.subr.mxu0 0.0
        %299 = vmatpush1.msra.mxu0 0.0
        %300 = vmatprep.subr.mxu0 0.0
        %301 = vmatpush1.msra.mxu0 0.0
        %302 = vmatprep.subr.mxu0 0.0
        %303 = vmatpush1.msra.mxu0 0.0
        %304 = vmatprep.subr.mxu0 0.0
        %305 = vmatpush1.msra.mxu0 0.0
        %306 = vmatprep.subr.mxu0 0.0
        %307 = vmatpush1.msra.mxu0 0.0
        %308 = vmatprep.subr.mxu0 0.0
        %309 = vmatpush1.msra.mxu0 0.0
        %310 = vmatprep.subr.mxu0 0.0
        %311 = vmatpush1.msra.mxu0 0.0
        %312 = vmatprep.subr.mxu0 0.0
        %313 = vmatpush1.msra.mxu0 0.0
        %314 = vmatprep.subr.mxu0 0.0
        %315 = vmatpush1.msra.mxu0 0.0
        %316 = vmatprep.subr.mxu0 0.0
        %317 = vmatpush1.msra.mxu0 0.0
        %318 = vmatprep.subr.mxu0 0.0
        %319 = vmatpush1.msra.mxu0 0.0
        %320 = vmatprep.subr.mxu0 0.0
        %321 = vmatpush1.msra.mxu0 0.0
        %322 = vmatprep.subr.mxu0 0.0
        %323 = vmatpush1.msra.mxu0 %v283
        %324 = vmatprep.subr.mxu0 0.0
        %325 = vmatpush1.msra.mxu0 %v282
        %326 = vmatprep.subr.mxu0 0.0
        %327 = vmatpush1.msra.mxu0 %v281
        %328 = vmatprep.subr.mxu0 0.0
        %329 = vmatpush1.msra.mxu0 %v280
        %330 = vmatprep.subr.mxu0 0.0
        %331 = vmatpush2.msra.mxu0 0.0
        %332 = vmatprep.subr.mxu0 0.0
        %333 = vmatpush2.msra.mxu0 0.0
        %334 = vmatprep.subr.mxu0 0.0
        %335 = vmatpush2.msra.mxu0 0.0
        %336 = vmatprep.subr.mxu0 0.0
        %337 = vmatpush2.msra.mxu0 0.0
        %338 = vmatprep.subr.mxu0 0.0
        %339 = vmatpush2.msra.mxu0 0.0
        %340 = vmatprep.subr.mxu0 0.0
        %341 = vmatpush2.msra.mxu0 0.0
        %342 = vmatprep.subr.mxu0 0.0
        %343 = vmatpush2.msra.mxu0 0.0
        %344 = vmatprep.subr.mxu0 0.0
        %345 = vmatpush2.msra.mxu0 0.0
        %346 = vmatprep.subr.mxu0 0.0
        %347 = vmatpush2.msra.mxu0 0.0
        %348 = vmatprep.subr.mxu0 0.0
        %349 = vmatpush2.msra.mxu0 0.0
        %350 = vmatprep.subr.mxu0 0.0
        %351 = vmatpush2.msra.mxu0 0.0
        %352 = vmatprep.subr.mxu0 0.0
        %353 = vmatpush2.msra.mxu0 0.0
        %354 = vmatprep.subr.mxu0 0.0
        %355 = vmatpush2.msra.mxu0 0.0
        %356 = vmatprep.subr.mxu0 0.0
        %357 = vmatpush2.msra.mxu0 0.0
        %358 = vmatprep.subr.mxu0 0.0
        %359 = vmatpush2.msra.mxu0 0.0
        %360 = vmatprep.subr.mxu0 0.0
        %361 = vmatpush2.msra.mxu0 0.0
        %362 = vmatprep.mubr.f32.mxu0 0.0
        %363 = vmatmul.mubr.f32.gmra.mxu0 %v293
        %v364 = vpop.f32.mrf.mxu0
        %v365 = vadd.f32 %v289, %v364
        %v366 = vpop.f32.mrf.mxu0
        %367 = vmatprep.mubr.f32.mxu0 0.0
        %368 = vmatmul.mubr.f32.gmra.mxu0 %v296
        %v369 = vpop.f32.mrf.mxu0
        %v370 = vadd.f32 %v289, %v369
        %v371 = vpop.f32.mrf.mxu0
        %372 = vdwg.mxu0
        %v373 = vsel %vm291, %v365, 0.0
        %374 = vadd.xlane.f32.xlu0 %v373
        %v375 = vpop.xlane.xlu0 %374
        %v376 = vsel %vm291, %v370, 0.0
        %377 = vadd.xlane.f32.xlu0 %v376
        %v378 = vpop.xlane.xlu0 %377
        %v379 = vrcp.pop 32.0
        %v380 = vmul.f32 %v375, %v379
        %v381 = vmul.f32 %v378, %v379
        %v382 = vsub.f32 %v365, %v380
        %v383 = vsub.f32 %v370, %v381
        %v384 = vmul.f32 %v382, %v382
        %v385 = vmul.f32 %v383, %v383
        %v386 = vsel %vm291, %v384, 0.0
        %387 = vadd.xlane.f32.xlu0 %v386
        %v388 = vpop.xlane.xlu0 %387
        %v389 = vsel %vm291, %v385, 0.0
        %390 = vadd.xlane.f32.xlu0 %v389
        %v391 = vpop.xlane.xlu0 %390
        %v392 = vmul.f32 %v388, %v379
        %v393 = vmul.f32 %v391, %v379
        %v394 = vadd.f32 %v392, 1e-05
        %v395 = vadd.f32 %v393, 1e-05
        %v396 = vrsqrt.pop %v394
        %v397 = vrsqrt.pop %v395
        %v398 = vmul.f32 %v382, %v396
        %v399 = vmul.f32 %v383, %v397
        %v400 = vld [vmem:[%s3] sm:$0x1]
        %v402 = vlaneseq
        %v403 = vshrl.u32 %v402, 7
        %v404 = vsub.s32 0, %v403
        %v405 = vrot.slane %v400, %v404
        %v407 = vmul.f32 %v398, %v405
        %v408 = vmul.f32 %v399, %v405
        %v409 = vld [vmem:[%s4] sm:$0x1]
        %v411 = vlaneseq
        %v412 = vshrl.u32 %v411, 7
        %v413 = vsub.s32 0, %v412
        %v414 = vrot.slane %v409, %v413
        %v416 = vadd.f32 %v407, %v414
        %v417 = vadd.f32 %v408, %v414
        %v418 = vxor.u32 %v416, 2147483648
        %v419 = vxor.u32 %v417, 2147483648
        %v420 = vmul.f32 %v418, 1.442695
        %v421 = vpow.pop %v420
        %v422 = vmul.f32 %v419, 1.442695
        %v423 = vpow.pop %v422
        %v424 = vadd.f32 %v421, 1.0
        %v425 = vadd.f32 %v423, 1.0
        %v426 = vrcp.pop %v424
        %v427 = vmul.f32 1.0, %v426
        %v428 = vrcp.pop %v425
        %v429 = vmul.f32 1.0, %v428
        %v430 = vmul.f32 %v416, %v427
        %v431 = vmul.f32 %v417, %v429
        %432 = vst.msk [vmem:[%s275] sm:$0xff] %vm291, %v430
        %433 = vst.msk [vmem:[%s275 + $0x8] sm:$0xff] %vm291, %v431
        %s434 = sand.u32 %s157, 1
        %s435 = scalar_lea.sflag [#allocation4], %s434
        %s436 = sand.u32 %s157, 1
        %s437 = smul.addr %s436, 16
        %s438 = scalar_lea.vmem [#allocation7], %s437
        // Predicated region
        $region49: #{tpu_custom_call.1} parent=39 // pred_check
          %p439 = pneg %p167
        $region50: #{tpu_custom_call.1} parent=39 // pred_check_branch
          %441 = sbr.rel (%p439) target = $region52
        $region51: #{tpu_custom_call.1} parent=39 // pred_region
          %s442 = smul.u32 2, %s28
          %s444 = ssub.s32 256, 256
          %445 = vsyncadd %s435, %s444
          %s446 = smul.addr %s27, 2
          %s447 = sadd.s32 %s442, %s446
          %s448 = smul.addr %s447, 128
          %s449 = scalar_lea.hbm %s5, %s448
          %s450 = sshll.u32 %s438, 4
          %s451 = int_to_ptr.vmem [resolvable:$true] %s450
          %456 = dma.vmem_to_hbm [thread:$0]  %s451, 256, %s449, %s435, 128, 128, 8
        $region52: #{tpu_custom_call.1} parent=39 // pred_fallthru
          _
      $region40: #{tpu_custom_call.1} parent=5 // pred_fallthru
        _
      %p457 = scmp.le.s32.totalorder 2, %s18
      // Predicated region
      $region53: #{tpu_custom_call.1} parent=5 // pred_check
        %p458 = pneg %p457
      $region54: #{tpu_custom_call.1} parent=5 // pred_check_branch
        %460 = sbr.rel (%p458) target = $region56
      $region55: #{tpu_custom_call.1} parent=5 // pred_region
        %s461 = ssub.s32 %s18, 2
        // Predicated region
        $region57: #{tpu_custom_call.1} parent=55 // pred_check
          %p462 = pneg %p173
        $region58: #{tpu_custom_call.1} parent=55 // pred_check_branch
          %464 = sbr.rel (%p462) target = $region60
        $region59: #{tpu_custom_call.1} parent=55 // pred_region
          %s465 = sand.u32 %s158, 1
          %s466 = scalar_lea.sflag [#allocation4], %s465
          %s467 = sand.u32 %s158, 1
          %s468 = smul.addr %s467, 16
          %s469 = scalar_lea.vmem [#allocation7], %s468
          %470 = dma.done %s466, 256
        $region60: #{tpu_custom_call.1} parent=55 // pred_fallthru
          _
      $region56: #{tpu_custom_call.1} parent=5 // pred_fallthru
        _
    $region6: #{tpu_custom_call.1} parent=1 // loop_footer
      %s22 = sadd.s32 1, %s18
    $region7: #{tpu_custom_call.1} parent=1 // loop_footer_branch
      %17 = sbr.rel target = $region3
    $region8: #{tpu_custom_call.1} parent=1 // loop_exit
      _
    %471 = vsyncpa [#allocation3], 1
    %s472 = scalar_lea.sflag [#allocation3], 1
    %473 = vsyncpa %s472, 1
    %474 = vsyncpa [#allocation6], 1
    %475 = vsyncpa [#allocation4], 1
    %s476 = scalar_lea.sflag [#allocation4], 1
    %477 = vsyncpa %s476, 1

</llo_original>
